<compile_context>
chip_gen: v5e
topology: v5e:2x2
jax: 0.10.0
libtpu: 0.0.40
codegen_flags: <defaults>
</compile_context>

<pallas_src>
import jax
import jax.numpy as jnp
from jax.experimental import pallas as pl
from jax.experimental.pallas import tpu as pltpu


def _scale_kernel(scale_ref, x_ref, o_ref):
    # scale_ref: (1,) fp32 parameter in SMEM.
    # x_ref / o_ref: VMEM tiles of the (lead, H, W) activation view.
    # Multiply in the activation's native dtype (skips the fp32 unpack/pack
    # VALU filler for bf16/fp16; exact for fp32).
    # NOTE: PyTorch's fp32 1-element nn.Parameter promotes bf16/fp16 inputs to
    # fp32 output; here the output keeps the activation dtype.
    s = scale_ref[0].astype(x_ref.dtype)
    o_ref[...] = x_ref[...] * s


def scale_forward(x: jax.Array, scale: jax.Array) -> jax.Array:
    """Apply `out = x * scale` (pysot Scale.forward) via a Pallas TPU kernel.

    x    : activation tensor (e.g. NCHW feature map), any float dtype
    scale: scalar / (1,) array (the nn.Parameter, fp32)
    """
    orig_shape = x.shape
    total = x.size
    itemsize = jnp.dtype(x.dtype).itemsize

    # Layout-free view: merge only the leading dims, keep the last two dims.
    if x.ndim >= 3:
        H, W = orig_shape[-2], orig_shape[-1]
        lead = total // (H * W)
    elif x.ndim == 2:
        lead, (H, W) = 1, orig_shape
    else:
        lead, H, W = 1, 1, max(total, 1)
    x3 = x.reshape(lead, H, W)

    # ~8 MiB per tile: big enough to sit on the HBM roofline on v5e/v6e/v7x,
    # and (in + out) x 2 double-buffers = 32 MiB stays under the explicit
    # 48 MiB VMEM limit below on every generation.
    tile_bytes_cap = 8 * 1024 * 1024
    slice_bytes = H * W * itemsize

    if slice_bytes <= tile_bytes_cap:
        tile_h = H
        tile_b = max(1, min(lead, tile_bytes_cap // max(slice_bytes, 1)))
        # Keep >= 2 grid steps when possible so the "parallel" axis has work
        # for both TensorCores on v7x (negligible cost on single-TC v5e/v6e).
        if lead >= 2:
            tile_b = min(tile_b, pl.cdiv(lead, 2))
    else:
        # A single (H, W) slice exceeds the cap: tile H instead.  The block's
        # second-to-last dim must be a multiple of 8 or the full dim.
        tile_b = 1
        row_bytes = W * itemsize
        tile_h = max(8, (tile_bytes_cap // max(row_bytes, 1)) // 8 * 8)
        if tile_h >= H:
            tile_h = H

    grid = (pl.cdiv(lead, tile_b), pl.cdiv(H, tile_h))

    scale_smem = jnp.asarray(scale, dtype=jnp.float32).reshape((1,))

    out3 = pl.pallas_call(
        _scale_kernel,
        out_shape=jax.ShapeDtypeStruct((lead, H, W), x.dtype),
        grid_spec=pltpu.PrefetchScalarGridSpec(
            num_scalar_prefetch=0,
            grid=grid,
            in_specs=[
                pl.BlockSpec(memory_space=pltpu.SMEM),                      # scalar param
                pl.BlockSpec((tile_b, tile_h, W), lambda i, j: (i, j, 0)),  # activation tile
            ],
            out_specs=pl.BlockSpec((tile_b, tile_h, W), lambda i, j: (i, j, 0)),
        ),
        compiler_params=pltpu.CompilerParams(
            dimension_semantics=("parallel", "parallel"),
            vmem_limit_bytes=48 << 20,
        ),
        cost_estimate=pl.CostEstimate(
            flops=total,
            transcendentals=0,
            bytes_accessed=2 * total * itemsize,
        ),
        # TODO(synk): with caller-side buffer donation, pass
        # input_output_aliases={1: 0} to run in place and drop the extra
        # output allocation.
    )(scale_smem, x3)

    return out3.reshape(orig_shape)


if __name__ == "__main__":
    key = jax.random.PRNGKey(0)

    # Deterministic parameter, mirroring Scale(init_value=1.0) but with a
    # non-trivial value so the multiply is observable.
    init_value = 1.5
    scale_param = jnp.array([init_value], dtype=jnp.float32)

    # Small NCHW input consistent with an FCOS head feature map.
    x = jax.random.normal(key, (2, 4, 16, 16), dtype=jnp.float32)

    out = scale_forward(x, scale_param)
    out = jax.block_until_ready(out)

    ref = x * scale_param[0]
    assert out.shape == x.shape and out.dtype == x.dtype
    assert jnp.allclose(out, ref, atol=1e-6, rtol=1e-6)

    print("KERNEL_OK")
</pallas_src>

<mosaic_0001>
module attributes {stable_mosaic.version = 11 : i64} {
  func.func @_scale_kernel(%arg0: i32, %arg1: i32, %arg2: memref<1xf32, #tpu.memory_space<smem>>, %arg3: memref<4x16x16xf32, #tpu.memory_space<vmem>>, %arg4: memref<4x16x16xf32, #tpu.memory_space<vmem>>) attributes {dimension_semantics = [#tpu.dimension_semantics<parallel>, #tpu.dimension_semantics<parallel>], iteration_bounds = array<i64: 2, 1>, scalar_prefetch = 0 : i64, scratch_operands = 0 : i64, tpu.core_type = #tpu.core_type<tc>, window_params = [{transform_indices = @transform_0, window_bounds = array<i64: 1>}, {transform_indices = @transform_1, window_bounds = array<i64: 4, 16, 16>}, {transform_indices = @transform_2, window_bounds = array<i64: 4, 16, 16>}]} {
    %c0 = arith.constant 0 : index
    %0 = memref.load %arg2[%c0] : memref<1xf32, #tpu.memory_space<smem>>
    %c0_0 = arith.constant 0 : index
    %c0_1 = arith.constant 0 : index
    %c0_2 = arith.constant 0 : index
    %1 = vector.load %arg3[%c0_0, %c0_1, %c0_2] : memref<4x16x16xf32, #tpu.memory_space<vmem>>, vector<4x16x16xf32>
    %2 = vector.broadcast %0 : f32 to vector<4x16x16xf32>
    %3 = arith.mulf %1, %2 : vector<4x16x16xf32>
    %c0_3 = arith.constant 0 : index
    %c0_4 = arith.constant 0 : index
    %c0_5 = arith.constant 0 : index
    %4 = vector.load %arg4[%c0_3, %c0_4, %c0_5] : memref<4x16x16xf32, #tpu.memory_space<vmem>>, vector<4x16x16xf32>
    tpu.vector_store %arg4[%c0_3, %c0_4, %c0_5], %3 {strides = array<i32>} : memref<4x16x16xf32, #tpu.memory_space<vmem>>, vector<4x16x16xf32>,
    return
  }
  func.func @transform_0(%arg0: i32, %arg1: i32) -> i32 {
    %c0_i32 = arith.constant 0 : i32
    %c0_i32_0 = arith.constant 0 : i32
    return %c0_i32 : i32
  }
  func.func @transform_1(%arg0: i32, %arg1: i32) -> (i32, i32, i32) {
    %c0_i32 = arith.constant 0 : i32
    %c0_i32_0 = arith.constant 0 : i32
    return %arg0, %arg1, %c0_i32 : i32, i32, i32
  }
  func.func @transform_2(%arg0: i32, %arg1: i32) -> (i32, i32, i32) {
    %c0_i32 = arith.constant 0 : i32
    %c0_i32_0 = arith.constant 0 : i32
    return %arg0, %arg1, %c0_i32 : i32, i32, i32
  }
}

</mosaic_0001>

<llo_original>
// kernel: tpu_custom_call.1
$region0: #{tpu_custom_call.1}
  #allocation0 [shape = 'u32[]', space=smem, size = 0x4, offset = 0x4, fixed_abs, tag = 'smem constant byte address 0x4 - core index']
  #allocation1 [shape = 'u32[72,128]{1,0:T(1,128)}', space=vmem, size = 0x9000, scoped, tag = 'internal scratch']
  #allocation2 [shape = 'f32[1]{0:T(128)S(6)}', space=smem, size = 0x200, scoped, tag = 'scoped memory for tpu_custom_call.1']
  %s0 = inlined_call_operand.<no memory space> [shape: f32[1], index: 0, kind: input, shape index: {}]
  %s1 = inlined_call_operand.hbm [shape: f32[8,16,16], index: 1, kind: input, shape index: {}]
  %s2 = inlined_call_operand.hbm [shape: f32[8,16,16], index: 2, kind: output, shape index: {}]
  %s3 = sld [smem:[#allocation0]]
  $region45: #{tpu_custom_call.1} parent=0
    _
  %s5 = ssub.s32 1, %s3
  %s6 = scalar_select 0, %s5, %s3
  %7 = sst [smem:[#allocation2]] %s0
  $region1: #{tpu_custom_call.1} parent=0
    #allocation3 [shape = 'u8[65536]{0}', space=vmem, size = 0x10000, scoped, tag = 'input window, operand 1']
    #allocation4 [shape = 's32[2]{0}', space=sflag, size = 0x8, scoped, tag = 'scoped memory for tpu_custom_call.1']
    #allocation5 [shape = 's32[2]{0}', space=sflag, size = 0x8, scoped, tag = 'scoped memory for tpu_custom_call.1']
    #allocation6 [shape = 'u8[65536]{0}', space=vmem, size = 0x10000, scoped, tag = 'output window, operand 0']
    %8 = vsyncpa [#allocation4], 0
    %s9 = scalar_lea.sflag [#allocation4], 1
    %10 = vsyncpa %s9, 0
    %11 = vsyncpa [#allocation5], 0
    %s12 = scalar_lea.sflag [#allocation5], 1
    %13 = vsyncpa %s12, 0
    loop: start=0, step=1, limit=4
    $region2: #{tpu_custom_call.1} parent=1 // loop_pre_header
      _
    $region3: #{tpu_custom_call.1} parent=1 // loop_header
      %s15 = sphi 0, %s19
      %p16 = scmp.ge.s32.totalorder %s15, 4
      %s22 = sphi 0, %s34
      %s23 = sphi 0, %s30
      %s24 = sphi 0, %s22
      %s25 = sphi 0, %s23
      %s26 = sphi 0, %s24
      %s27 = sphi 0, %s25
      %s35 = sphi 0, %s35
      %s37 = sphi 0, %s35
      %s38 = sphi 0, %s37
      %s52 = sphi 0, %s38
      %s60 = sphi 0, %s62
      %s63 = sphi 0, %s60
      %s64 = sphi 0, %s63
      %s80 = sphi 0, %s64
      %s88 = sphi 0, %s90
      %s91 = sphi 0, %s88
      %s92 = sphi 0, %s91
      %s108 = sphi 0, %s92
    $region4: #{tpu_custom_call.1} parent=1 // loop_header_branch
      %18 = sbr.rel (%p16) target = $region8
    $region5: #{tpu_custom_call.1} parent=1 // loop_body
      %s20 = ssub.s32 %s15, 1
      %s21 = ssub.s32 %s15, 2
      %s28 = sadd.s32 1, %s23
      %p29 = scmp.ge.s32.totalorder %s28, 1
      %s30 = scalar_select %p29, 0, %s28
      %s31 = sadd.s32 1, %s22
      %s32 = scalar_select %p29, %s31, %s22
      %p33 = scmp.ge.s32.totalorder %s32, 2
      %s34 = scalar_select %p33, 0, %s32
      %s36 = sadd.s32 %s35, 1
      %p39 = scmp.eq.s32.totalorder %s15, 1
      %p40 = scmp.ne.s32.totalorder %s35, %s37
      %p41 = scmp.eq.s32.totalorder %s15, 0
      %p42 = por %p40, %p41
      %p43 = scmp.ne.s32.totalorder %s35, %s37
      %p44 = scmp.eq.s32.totalorder %s20, 1
      %p45 = por %p43, %p44
      %p46 = scmp.ne.s32.totalorder %s37, %s38
      %p47 = scmp.eq.s32.totalorder %s20, 0
      %p48 = por %p46, %p47
      %p49 = scmp.ne.s32.totalorder %s37, %s38
      %p50 = scmp.eq.s32.totalorder %s21, 1
      %p51 = por %p49, %p50
      %p53 = scmp.ne.s32.totalorder %s38, %s52
      %p54 = scmp.eq.s32.totalorder %s21, 0
      %p55 = por %p53, %p54
      %s56 = ssub.s32 %s22, %s34
      %s57 = ssub.s32 %s23, %s30
      %s58 = sor.u32 %s56, %s57
      %p59 = scmp.eq.s32.totalorder %s58, 0
      %s61 = sadd.s32 %s60, 1
      %s62 = scalar_select %p59, %s60, %s61
      %p65 = pneg %p59
      %p66 = scmp.eq.s32.totalorder %s15, 1
      %p67 = por %p65, %p66
      %p68 = scmp.ne.s32.totalorder %s60, %s63
      %p69 = scmp.eq.s32.totalorder %s15, 0
      %p70 = por %p68, %p69
      %p71 = scmp.ne.s32.totalorder %s60, %s63
      %p72 = scmp.eq.s32.totalorder %s20, 1
      %p73 = por %p71, %p72
      %p74 = scmp.ne.s32.totalorder %s63, %s64
      %p75 = scmp.eq.s32.totalorder %s20, 0
      %p76 = por %p74, %p75
      %p77 = scmp.ne.s32.totalorder %s63, %s64
      %p78 = scmp.eq.s32.totalorder %s21, 1
      %p79 = por %p77, %p78
      %p81 = scmp.ne.s32.totalorder %s64, %s80
      %p82 = scmp.eq.s32.totalorder %s21, 0
      %p83 = por %p81, %p82
      %s84 = ssub.s32 %s22, %s34
      %s85 = ssub.s32 %s23, %s30
      %s86 = sor.u32 %s84, %s85
      %p87 = scmp.eq.s32.totalorder %s86, 0
      %s89 = sadd.s32 %s88, 1
      %s90 = scalar_select %p87, %s88, %s89
      %p93 = pneg %p87
      %p94 = scmp.eq.s32.totalorder %s15, 1
      %p95 = por %p93, %p94
      %p96 = scmp.ne.s32.totalorder %s88, %s91
      %p97 = scmp.eq.s32.totalorder %s15, 0
      %p98 = por %p96, %p97
      %p99 = scmp.ne.s32.totalorder %s88, %s91
      %p100 = scmp.eq.s32.totalorder %s20, 1
      %p101 = por %p99, %p100
      %p102 = scmp.ne.s32.totalorder %s91, %s92
      %p103 = scmp.eq.s32.totalorder %s20, 0
      %p104 = por %p102, %p103
      %p105 = scmp.ne.s32.totalorder %s91, %s92
      %p106 = scmp.eq.s32.totalorder %s21, 1
      %p107 = por %p105, %p106
      %p109 = scmp.ne.s32.totalorder %s92, %s108
      %p110 = scmp.eq.s32.totalorder %s21, 0
      %p111 = por %p109, %p110
      %p112 = scmp.le.s32.totalorder 1, %s15
      %p113 = scmp.lt.s32.totalorder %s15, 3
      %p114 = pnand %p112, %p113
      %p115 = pneg %p114
      // Predicated region
      $region9: #{tpu_custom_call.1} parent=5 // pred_check
        _
      $region10: #{tpu_custom_call.1} parent=5 // pred_check_branch
        %117 = sbr.rel (%p114) target = $region12
      $region11: #{tpu_custom_call.1} parent=5 // pred_region
        %s118 = ssub.s32 %s15, 1
        // Predicated region
        $region13: #{tpu_custom_call.1} parent=11 // pred_check
          %p119 = pneg %p48
        $region14: #{tpu_custom_call.1} parent=11 // pred_check_branch
          %121 = sbr.rel (%p119) target = $region16
        $region15: #{tpu_custom_call.1} parent=11 // pred_region
          _
        $region16: #{tpu_custom_call.1} parent=11 // pred_fallthru
          _
      $region12: #{tpu_custom_call.1} parent=5 // pred_fallthru
        _
      %p122 = scmp.lt.s32.totalorder %s15, 2
      // Predicated region
      $region17: #{tpu_custom_call.1} parent=5 // pred_check
        %p123 = pneg %p122
      $region18: #{tpu_custom_call.1} parent=5 // pred_check_branch
        %125 = sbr.rel (%p123) target = $region20
      $region19: #{tpu_custom_call.1} parent=5 // pred_region
        // Predicated region
        $region21: #{tpu_custom_call.1} parent=19 // pred_check
          %p126 = pneg %p70
        $region22: #{tpu_custom_call.1} parent=19 // pred_check_branch
          %128 = sbr.rel (%p126) target = $region24
        $region23: #{tpu_custom_call.1} parent=19 // pred_region
          %s129 = sand.u32 %s60, 1
          %s130 = scalar_lea.sflag [#allocation4], %s129
          %s131 = sand.u32 %s60, 1
          %s132 = smul.addr %s131, 64
          %s133 = scalar_lea.vmem [#allocation3], %s132
          %s134 = smul.u32 4, %s22
          %s135 = smul.u32 2, %s23
          %137 = vsyncadd %s130, 0
          %s138 = smul.addr %s134, 2
          %s139 = sadd.s32 %s135, %s138
          %s140 = smul.addr %s139, 8
          %s141 = scalar_lea.hbm %s1, %s140
          %s142 = sshll.u32 %s141, 4
          %s143 = int_to_ptr.hbm [resolvable:$true] %s142
          %s144 = sshll.u32 %s133, 4
          %s145 = int_to_ptr.vmem [resolvable:$true] %s144
          %150 = dma.hbm_to_vmem [thread:$0]  %s143, 1024, %s145, %s130, 128, 128, 8
        $region24: #{tpu_custom_call.1} parent=19 // pred_fallthru
          _
      $region20: #{tpu_custom_call.1} parent=5 // pred_fallthru
        _
      %p151 = scmp.le.s32.totalorder 1, %s15
      %p152 = scmp.lt.s32.totalorder %s15, 3
      %p153 = pnand %p151, %p152
      %p154 = pneg %p153
      // Predicated region
      $region25: #{tpu_custom_call.1} parent=5 // pred_check
        _
      $region26: #{tpu_custom_call.1} parent=5 // pred_check_branch
        %156 = sbr.rel (%p153) target = $region28
      $region27: #{tpu_custom_call.1} parent=5 // pred_region
        %s157 = ssub.s32 %s15, 1
        %s158 = sand.u32 %s63, 1
        %s159 = scalar_lea.sflag [#allocation4], %s158
        %s160 = sand.u32 %s63, 1
        %s161 = smul.addr %s160, 64
        %s162 = scalar_lea.vmem [#allocation3], %s161
        // Predicated region
        $region29: #{tpu_custom_call.1} parent=27 // pred_check
          %p163 = pneg %p76
        $region30: #{tpu_custom_call.1} parent=27 // pred_check_branch
          %165 = sbr.rel (%p163) target = $region32
        $region31: #{tpu_custom_call.1} parent=27 // pred_region
          %167 = dma.done %s159, 1024
        $region32: #{tpu_custom_call.1} parent=27 // pred_fallthru
          _
        %p168 = pneg %p48
        %p169 = pneg %p45
        %s170 = sand.u32 %s63, 1
        %s171 = scalar_lea.sflag [#allocation4], %s170
        %s172 = sand.u32 %s63, 1
        %s173 = smul.addr %s172, 64
        %s174 = scalar_lea.vmem [#allocation3], %s173
        %p175 = pneg %p76
        %p176 = pneg %p73
        %p177 = pneg %p104
        %p178 = pneg %p101
        %s179 = sand.u32 %s91, 1
        %s180 = scalar_lea.sflag [#allocation5], %s179
        %s181 = sand.u32 %s91, 1
        %s182 = smul.addr %s181, 64
        %s183 = scalar_lea.vmem [#allocation6], %s182
        %s184 = smul.u32 4, %s24
        %s185 = smul.u32 2, %s25
        %s186 = smul.u32 4, %s24
        %s187 = smul.u32 2, %s25
        %s188 = sld [smem:[#allocation2]]
        %v189 = vld [vmem:[%s162] sm:$0xff]
        %v190 = vld [vmem:[%s162 + $0x8] sm:$0xff]
        %v191 = vld [vmem:[%s162 + $0x10] sm:$0xff]
        %v192 = vld [vmem:[%s162 + $0x18] sm:$0xff]
        %v193 = vld [vmem:[%s162 + $0x20] sm:$0xff]
        %v194 = vld [vmem:[%s162 + $0x28] sm:$0xff]
        %v195 = vld [vmem:[%s162 + $0x30] sm:$0xff]
        %v196 = vld [vmem:[%s162 + $0x38] sm:$0xff]
        %v197 = vstv %s188
        %v198 = vmul.f32 %v189, %v197
        %v199 = vmul.f32 %v190, %v197
        %v200 = vmul.f32 %v191, %v197
        %v201 = vmul.f32 %v192, %v197
        %v202 = vmul.f32 %v193, %v197
        %v203 = vmul.f32 %v194, %v197
        %v204 = vmul.f32 %v195, %v197
        %v205 = vmul.f32 %v196, %v197
        %vm206 = vcmask 130048
        %207 = vst.msk [vmem:[%s183] sm:$0xff] %vm206, %v198
        %208 = vst.msk [vmem:[%s183 + $0x8] sm:$0xff] %vm206, %v199
        %209 = vst.msk [vmem:[%s183 + $0x10] sm:$0xff] %vm206, %v200
        %210 = vst.msk [vmem:[%s183 + $0x18] sm:$0xff] %vm206, %v201
        %211 = vst.msk [vmem:[%s183 + $0x20] sm:$0xff] %vm206, %v202
        %212 = vst.msk [vmem:[%s183 + $0x28] sm:$0xff] %vm206, %v203
        %213 = vst.msk [vmem:[%s183 + $0x30] sm:$0xff] %vm206, %v204
        %214 = vst.msk [vmem:[%s183 + $0x38] sm:$0xff] %vm206, %v205
        %s215 = sand.u32 %s91, 1
        %s216 = scalar_lea.sflag [#allocation5], %s215
        %s217 = sand.u32 %s91, 1
        %s218 = smul.addr %s217, 64
        %s219 = scalar_lea.vmem [#allocation6], %s218
        // Predicated region
        $region33: #{tpu_custom_call.1} parent=27 // pred_check
          %p220 = pneg %p101
        $region34: #{tpu_custom_call.1} parent=27 // pred_check_branch
          %222 = sbr.rel (%p220) target = $region36
        $region35: #{tpu_custom_call.1} parent=27 // pred_region
          %s223 = smul.u32 4, %s24
          %s224 = smul.u32 2, %s25
          %226 = vsyncadd %s216, 0
          %s227 = smul.addr %s223, 2
          %s228 = sadd.s32 %s224, %s227
          %s229 = smul.addr %s228, 8
          %s230 = scalar_lea.hbm %s2, %s229
          %s231 = sshll.u32 %s219, 4
          %s232 = int_to_ptr.vmem [resolvable:$true] %s231
          %s233 = sshll.u32 %s230, 4
          %s234 = int_to_ptr.hbm [resolvable:$true] %s233
          %239 = dma.vmem_to_hbm [thread:$0]  %s232, 1024, %s234, %s216, 128, 128, 8
        $region36: #{tpu_custom_call.1} parent=27 // pred_fallthru
          _
      $region28: #{tpu_custom_call.1} parent=5 // pred_fallthru
        _
      %p240 = scmp.le.s32.totalorder 2, %s15
      // Predicated region
      $region37: #{tpu_custom_call.1} parent=5 // pred_check
        %p241 = pneg %p240
      $region38: #{tpu_custom_call.1} parent=5 // pred_check_branch
        %243 = sbr.rel (%p241) target = $region40
      $region39: #{tpu_custom_call.1} parent=5 // pred_region
        %s244 = ssub.s32 %s15, 2
        // Predicated region
        $region41: #{tpu_custom_call.1} parent=39 // pred_check
          %p245 = pneg %p107
        $region42: #{tpu_custom_call.1} parent=39 // pred_check_branch
          %247 = sbr.rel (%p245) target = $region44
        $region43: #{tpu_custom_call.1} parent=39 // pred_region
          %s248 = sand.u32 %s92, 1
          %s249 = scalar_lea.sflag [#allocation5], %s248
          %s250 = sand.u32 %s92, 1
          %s251 = smul.addr %s250, 64
          %s252 = scalar_lea.vmem [#allocation6], %s251
          %254 = dma.done %s249, 1024
        $region44: #{tpu_custom_call.1} parent=39 // pred_fallthru
          _
      $region40: #{tpu_custom_call.1} parent=5 // pred_fallthru
        _
    $region6: #{tpu_custom_call.1} parent=1 // loop_footer
      %s19 = sadd.s32 1, %s15
    $region7: #{tpu_custom_call.1} parent=1 // loop_footer_branch
      %14 = sbr.rel target = $region3
    $region8: #{tpu_custom_call.1} parent=1 // loop_exit
      _
    %255 = vsyncpa [#allocation4], 1
    %s256 = scalar_lea.sflag [#allocation4], 1
    %257 = vsyncpa %s256, 1
    %258 = vsyncpa [#allocation5], 1
    %s259 = scalar_lea.sflag [#allocation5], 1
    %260 = vsyncpa %s259, 1

</llo_original>
